<compile_context>
chip_gen: v6e
topology: v6e:2x2x1
jax: 0.10.0
libtpu: 0.0.40
codegen_flags: <defaults>
</compile_context>

<pallas_src>
import functools

import jax
import jax.numpy as jnp
from jax import lax
from jax.experimental import pallas as pl
from jax.experimental.pallas import tpu as pltpu


def _amodal_kernel(x_ref, w_ref, b_ref, o_ref, *, apply_softmax: bool):
    # x_ref: (TM, D), w_ref: (2, D), b_ref: (1, 2), o_ref: (TM, 2)
    x = x_ref[...].astype(jnp.float32)
    w = w_ref[...].astype(jnp.float32)
    b = b_ref[...].astype(jnp.float32)

    # Linear layer: contract x dim 1 against weight dim 1 (i.e. x @ W.T),
    # keeping the weight in its natural, lane-dense (2, dim_in) layout.
    logits = lax.dot_general(
        x, w,
        dimension_numbers=(((1,), (1,)), ((), ())),
        preferred_element_type=jnp.float32,
    ) + b                                                     # (TM, 2)

    if apply_softmax:
        # 2-class softmax == sigmoid of the logit difference.
        d = logits[:, 1:2] - logits[:, 0:1]                   # (TM, 1)
        p1 = jax.nn.sigmoid(d)
        p0 = 1.0 - p1
        out = jnp.concatenate([p0, p1], axis=1)               # (TM, 2)
    else:
        out = logits

    o_ref[...] = out.astype(o_ref.dtype)


def _pick_row_tile(n: int, dim_in: int, itemsize: int = 4) -> int:
    """Largest row tile whose x double-buffer fits in ~16 MiB (safe on all gens)."""
    budget = 16 * 1024 * 1024
    tm_cap = max(8, budget // (2 * dim_in * itemsize))
    tm = min(1024, tm_cap)
    tm = max(8, (tm // 8) * 8)          # multiple of 8 (sublane alignment)
    if n <= tm:
        return n                        # single full-extent block
    return tm


def fast_rcnn_amodal_outputs_forward(x, weight, bias, *, training: bool = False,
                                     row_tile: int | None = None):
    """Forward pass of fast_rcnn_amodal_outputs.

    x:      (N, dim_in) or (N, dim_in, 1, 1)   float32
    weight: (2, dim_in)                        float32  (PyTorch nn.Linear layout)
    bias:   (2,)                               float32
    returns (N, 2) float32 (softmaxed over classes unless training=True)
    """
    if x.ndim == 4:
        # mirror x.squeeze(3).squeeze(2)
        x = jnp.squeeze(jnp.squeeze(x, axis=3), axis=2)

    n, dim_in = x.shape
    b2 = bias.reshape(1, 2)                                   # (1, 2)

    itemsize = jnp.dtype(x.dtype).itemsize
    tm = row_tile if row_tile is not None else _pick_row_tile(n, dim_in, itemsize)
    grid = (pl.cdiv(n, tm),)

    kernel = functools.partial(_amodal_kernel, apply_softmax=not training)

    cost = pl.CostEstimate(
        flops=4 * n * dim_in,                                  # N x (2 x dim_in) MACs
        transcendentals=(0 if training else n),                # one sigmoid per row
        bytes_accessed=(n * dim_in * itemsize                  # x stream
                        + 2 * dim_in * itemsize                # weight
                        + 2 * itemsize                         # bias
                        + n * 2 * 4),                          # output
    )

    out = pl.pallas_call(
        kernel,
        out_shape=jax.ShapeDtypeStruct((n, 2), jnp.float32),
        grid_spec=pltpu.PrefetchScalarGridSpec(
            num_scalar_prefetch=0,
            grid=grid,
            in_specs=[
                # x: streamed row tiles (double-buffered by the pipeline).
                pl.BlockSpec((tm, dim_in), lambda i: (i, 0)),
                # weight / bias: resident across the whole grid.
                pl.BlockSpec((2, dim_in), lambda i: (0, 0)),
                pl.BlockSpec((1, 2), lambda i: (0, 0)),
            ],
            out_specs=pl.BlockSpec((tm, 2), lambda i: (i, 0)),
        ),
        compiler_params=pltpu.CompilerParams(
            dimension_semantics=("parallel",),   # shard row tiles across v7x TCs
            vmem_limit_bytes=32 * 1024 * 1024,
        ),
        cost_estimate=cost,
    )(x, weight, b2)
    return out


def _reference(x, weight, bias, training):
    if x.ndim == 4:
        x = jnp.squeeze(jnp.squeeze(x, axis=3), axis=2)
    logits = x @ weight.T + bias
    if training:
        return logits
    return jax.nn.softmax(logits, axis=1)


if __name__ == "__main__":
    key = jax.random.PRNGKey(0)
    k_x, k_w, k_x2 = jax.random.split(key, 3)

    # --- Test 1: small ROI-pooled features (N, dim_in, 1, 1), eval mode. ---
    N, DIM_IN = 8, 32
    x = jax.random.normal(k_x, (N, DIM_IN, 1, 1), dtype=jnp.float32)

    # Deterministic parameter init matching _init_weights:
    #   weight ~ Normal(0, 0.01), bias = 0
    weight = 0.01 * jax.random.normal(k_w, (2, DIM_IN), dtype=jnp.float32)
    bias = jnp.zeros((2,), dtype=jnp.float32)

    out = fast_rcnn_amodal_outputs_forward(x, weight, bias, training=False)
    out = jax.block_until_ready(out)
    ref = _reference(x, weight, bias, training=False)
    assert out.shape == (N, 2)
    assert jnp.allclose(out, ref, atol=1e-5, rtol=1e-5)

    # --- Test 2: exercise the row-tiled grid (partial last tile), eval mode. ---
    N2, DIM2 = 300, 64
    x2 = jax.random.normal(k_x2, (N2, DIM2), dtype=jnp.float32)
    w2 = 0.01 * jax.random.normal(k_w, (2, DIM2), dtype=jnp.float32)
    b2 = jnp.zeros((2,), dtype=jnp.float32)

    out2 = fast_rcnn_amodal_outputs_forward(x2, w2, b2, training=False,
                                            row_tile=128)   # grid=(3,), partial tail
    out2 = jax.block_until_ready(out2)
    ref2 = _reference(x2, w2, b2, training=False)
    assert out2.shape == (N2, 2)
    assert jnp.allclose(out2, ref2, atol=1e-5, rtol=1e-5)

    # --- Test 3: training mode returns raw logits. ---
    out3 = fast_rcnn_amodal_outputs_forward(x, weight, bias, training=True)
    out3 = jax.block_until_ready(out3)
    ref3 = _reference(x, weight, bias, training=True)
    assert jnp.allclose(out3, ref3, atol=1e-5, rtol=1e-5)

    print("KERNEL_OK")
</pallas_src>

<mosaic_0001>
module attributes {stable_mosaic.version = 11 : i64} {
  func.func @_amodal_kernel(%arg0: i32, %arg1: memref<8x32xf32, #tpu.memory_space<vmem>>, %arg2: memref<2x32xf32, #tpu.memory_space<vmem>>, %arg3: memref<1x2xf32, #tpu.memory_space<vmem>>, %arg4: memref<8x2xf32, #tpu.memory_space<vmem>>) attributes {dimension_semantics = [#tpu.dimension_semantics<parallel>], iteration_bounds = array<i64: 1>, scalar_prefetch = 0 : i64, scratch_operands = 0 : i64, tpu.core_type = #tpu.core_type<tc>, window_params = [{transform_indices = @transform_0, window_bounds = array<i64: 8, 32>}, {pipeline_mode = #tpu.pipeline_mode<synchronous>, transform_indices = @transform_1, window_bounds = array<i64: 2, 32>}, {pipeline_mode = #tpu.pipeline_mode<synchronous>, transform_indices = @transform_2, window_bounds = array<i64: 1, 2>}, {transform_indices = @transform_3, window_bounds = array<i64: 8, 2>}]} {
    %c0 = arith.constant 0 : index
    %c0_0 = arith.constant 0 : index
    %0 = vector.load %arg1[%c0, %c0_0] : memref<8x32xf32, #tpu.memory_space<vmem>>, vector<8x32xf32>
    %c0_1 = arith.constant 0 : index
    %c0_2 = arith.constant 0 : index
    %1 = vector.load %arg2[%c0_1, %c0_2] : memref<2x32xf32, #tpu.memory_space<vmem>>, vector<2x32xf32>
    %c0_3 = arith.constant 0 : index
    %c0_4 = arith.constant 0 : index
    %2 = vector.load %arg3[%c0_3, %c0_4] : memref<1x2xf32, #tpu.memory_space<vmem>>, vector<1x2xf32>
    %cst = arith.constant dense<0.000000e+00> : vector<8x2xf32>
    %3 = tpu.matmul %0, %1, %cst {dimension_numbers = #tpu.dot_dimension_numbers<[1], [1], [0], [0], [0, 0, 1, 0], [], []>} : vector<8x32xf32>, vector<2x32xf32>, vector<8x2xf32> -> vector<8x2xf32>
    %4 = vector.broadcast %2 : vector<1x2xf32> to vector<8x2xf32>
    %5 = arith.addf %3, %4 : vector<8x2xf32>
    %6 = vector.extract_strided_slice %5 {offsets = [0, 1], sizes = [8, 1], strides = [1, 1]} : vector<8x2xf32> to vector<8x1xf32>
    %7 = vector.extract_strided_slice %5 {offsets = [0, 0], sizes = [8, 1], strides = [1, 1]} : vector<8x2xf32> to vector<8x1xf32>
    %8 = arith.subf %6, %7 : vector<8x1xf32>
    %9 = arith.negf %8 : vector<8x1xf32>
    %10 = math.exp %9 : vector<8x1xf32>
    %cst_5 = arith.constant 1.000000e+00 : f32
    %11 = vector.broadcast %cst_5 : f32 to vector<8x1xf32>
    %12 = arith.addf %11, %10 : vector<8x1xf32>
    %13 = arith.divf %11, %12 : vector<8x1xf32>
    %cst_6 = arith.constant 1.000000e+00 : f32
    %14 = vector.broadcast %cst_6 : f32 to vector<8x1xf32>
    %15 = arith.subf %14, %13 : vector<8x1xf32>
    %16 = tpu.concatenate %15, %13 in 1 : vector<8x1xf32>, vector<8x1xf32> -> vector<8x2xf32>
    %c0_7 = arith.constant 0 : index
    %c0_8 = arith.constant 0 : index
    %17 = vector.load %arg4[%c0_7, %c0_8] : memref<8x2xf32, #tpu.memory_space<vmem>>, vector<8x2xf32>
    tpu.vector_store %arg4[%c0_7, %c0_8], %16 {strides = array<i32>} : memref<8x2xf32, #tpu.memory_space<vmem>>, vector<8x2xf32>,
    return
  }
  func.func @transform_0(%arg0: i32) -> (i32, i32) {
    %c0_i32 = arith.constant 0 : i32
    %c0_i32_0 = arith.constant 0 : i32
    return %arg0, %c0_i32 : i32, i32
  }
  func.func @transform_1(%arg0: i32) -> (i32, i32) {
    %c0_i32 = arith.constant 0 : i32
    %c0_i32_0 = arith.constant 0 : i32
    %c0_i32_1 = arith.constant 0 : i32
    return %c0_i32, %c0_i32_0 : i32, i32
  }
  func.func @transform_2(%arg0: i32) -> (i32, i32) {
    %c0_i32 = arith.constant 0 : i32
    %c0_i32_0 = arith.constant 0 : i32
    %c0_i32_1 = arith.constant 0 : i32
    return %c0_i32, %c0_i32_0 : i32, i32
  }
  func.func @transform_3(%arg0: i32) -> (i32, i32) {
    %c0_i32 = arith.constant 0 : i32
    %c0_i32_0 = arith.constant 0 : i32
    return %arg0, %c0_i32 : i32, i32
  }
}

</mosaic_0001>

<llo_original>
// kernel: tpu_custom_call.1
$region0: #{tpu_custom_call.1}
  #allocation0 [shape = 'u32[]', space=smem, size = 0x4, offset = 0x4, fixed_abs, tag = 'smem constant byte address 0x4 - core index']
  #allocation1 [shape = 'u32[144,128]{1,0:T(1,128)}', space=vmem, size = 0x12000, scoped, tag = 'internal scratch']
  %s0 = inlined_call_operand.hbm [shape: f32[8,32], index: 0, kind: input, shape index: {}]
  %s1 = inlined_call_operand.hbm [shape: f32[2,32], index: 1, kind: input, shape index: {}]
  %s2 = inlined_call_operand.vmem [shape: f32[1,2], index: 2, kind: input, shape index: {}]
  %s3 = inlined_call_operand.vmem [shape: f32[8,2], index: 3, kind: output, shape index: {}]
  %s4 = sld [smem:[#allocation0]]
  $region30: #{tpu_custom_call.1} parent=0
    _
  %s6 = ssub.s32 1, %s4
  %s7 = scalar_select 0, %s6, %s4
  $region1: #{tpu_custom_call.1} parent=0
    #allocation2 [shape = 'u8[4096]{0}', space=vmem, size = 0x1000, scoped, tag = 'input window, operand 0, single buffered']
    #allocation3 [shape = 's32[1]{0}', space=sflag, size = 0x4, scoped, tag = 'scoped memory for tpu_custom_call.1']
    #allocation4 [shape = 'u8[1024]{0}', space=vmem, size = 0x400, scoped, tag = 'input window, operand 1, single buffered']
    #allocation5 [shape = 's32[1]{0}', space=sflag, size = 0x4, scoped, tag = 'scoped memory for tpu_custom_call.1']
    %8 = vsyncpa [#allocation3], 0
    %9 = vsyncpa [#allocation5], 0
    // Predicated region
    $region2: #{tpu_custom_call.1} parent=1 // pred_check
      _
    $region3: #{tpu_custom_call.1} parent=1 // pred_check_branch
      %11 = sbr.rel (0) target = $region5
    $region4: #{tpu_custom_call.1} parent=1 // pred_region
      %s13 = ssub.s32 128, 128
      %14 = vsyncadd [#allocation3], %s13
      %s16 = sshll.u32 [#allocation2], 4
      %s17 = int_to_ptr.vmem [resolvable:$true] %s16
      %19 = dma.hbm_to_vmem [thread:$0]  %s0, 128, %s17, [#allocation3]
    $region5: #{tpu_custom_call.1} parent=1 // pred_fallthru
      _
    // Predicated region
    $region6: #{tpu_custom_call.1} parent=1 // pred_check
      _
    $region7: #{tpu_custom_call.1} parent=1 // pred_check_branch
      %21 = sbr.rel (0) target = $region9
    $region8: #{tpu_custom_call.1} parent=1 // pred_region
      %s23 = ssub.s32 32, 32
      %24 = vsyncadd [#allocation5], %s23
      %s26 = sshll.u32 [#allocation4], 4
      %s27 = int_to_ptr.vmem [resolvable:$true] %s26
      %29 = dma.hbm_to_vmem [thread:$0]  %s1, 32, %s27, [#allocation5]
    $region9: #{tpu_custom_call.1} parent=1 // pred_fallthru
      _
    // Predicated region
    $region10: #{tpu_custom_call.1} parent=1 // pred_check
      _
    $region11: #{tpu_custom_call.1} parent=1 // pred_check_branch
      %31 = sbr.rel (0) target = $region13
    $region12: #{tpu_custom_call.1} parent=1 // pred_region
      _
    $region13: #{tpu_custom_call.1} parent=1 // pred_fallthru
      _
    // Predicated region
    $region14: #{tpu_custom_call.1} parent=1 // pred_check
      _
    $region15: #{tpu_custom_call.1} parent=1 // pred_check_branch
      %33 = sbr.rel (0) target = $region17
    $region16: #{tpu_custom_call.1} parent=1 // pred_region
      %34 = dma.done [#allocation3], 128
    $region17: #{tpu_custom_call.1} parent=1 // pred_fallthru
      _
    // Predicated region
    $region18: #{tpu_custom_call.1} parent=1 // pred_check
      _
    $region19: #{tpu_custom_call.1} parent=1 // pred_check_branch
      %36 = sbr.rel (0) target = $region21
    $region20: #{tpu_custom_call.1} parent=1 // pred_region
      %37 = dma.done [#allocation5], 32
    $region21: #{tpu_custom_call.1} parent=1 // pred_fallthru
      _
    %v38 = vld [vmem:[#allocation2] sm:$0xff]
    %v39 = vld [vmem:[#allocation4] sm:$0x3]
    %v40 = vld [vmem:[%s2] sm:$0x1]
    %v42 = vlaneseq
    %v43 = vshrl.u32 %v42, 7
    %v44 = vsub.s32 0, %v43
    %v45 = vrot.slane %v40, %v44
    %vm47 = vcmask 261120
    %v49 = vsel %vm47, %v38, 0
    %v52 = vsel %vm47, %v39, 0
    %54 = vmatprep.subr.mxu0 0.0
    %55 = vmatpush1.xpose.msra.mxu0 0.0
    %56 = vmatprep.subr.mxu0 0.0
    %57 = vmatpush1.xpose.msra.mxu0 0.0
    %58 = vmatprep.subr.mxu0 0.0
    %59 = vmatpush1.xpose.msra.mxu0 0.0
    %60 = vmatprep.subr.mxu0 0.0
    %61 = vmatpush1.xpose.msra.mxu0 0.0
    %62 = vmatprep.subr.mxu0 0.0
    %63 = vmatpush1.xpose.msra.mxu0 0.0
    %64 = vmatprep.subr.mxu0 0.0
    %65 = vmatpush1.xpose.msra.mxu0 0.0
    %66 = vmatprep.subr.mxu0 0.0
    %67 = vmatpush1.xpose.msra.mxu0 0.0
    %68 = vmatprep.subr.mxu0 0.0
    %69 = vmatpush1.xpose.msra.mxu0 0.0
    %70 = vmatprep.subr.mxu0 0.0
    %71 = vmatpush1.xpose.msra.mxu0 0.0
    %72 = vmatprep.subr.mxu0 0.0
    %73 = vmatpush1.xpose.msra.mxu0 0.0
    %74 = vmatprep.subr.mxu0 0.0
    %75 = vmatpush1.xpose.msra.mxu0 0.0
    %76 = vmatprep.subr.mxu0 0.0
    %77 = vmatpush1.xpose.msra.mxu0 0.0
    %78 = vmatprep.subr.mxu0 0.0
    %79 = vmatpush1.xpose.msra.mxu0 0.0
    %80 = vmatprep.subr.mxu0 0.0
    %81 = vmatpush1.xpose.msra.mxu0 0.0
    %82 = vmatprep.subr.mxu0 0.0
    %83 = vmatpush1.xpose.msra.mxu0 0.0
    %84 = vmatprep.subr.mxu0 0.0
    %85 = vmatpush1.xpose.msra.mxu0 %v52
    %86 = vmatprep.subr.mxu0 0.0
    %87 = vmatpush2.xpose.msra.mxu0 0.0
    %88 = vmatprep.subr.mxu0 0.0
    %89 = vmatpush2.xpose.msra.mxu0 0.0
    %90 = vmatprep.subr.mxu0 0.0
    %91 = vmatpush2.xpose.msra.mxu0 0.0
    %92 = vmatprep.subr.mxu0 0.0
    %93 = vmatpush2.xpose.msra.mxu0 0.0
    %94 = vmatprep.subr.mxu0 0.0
    %95 = vmatpush2.xpose.msra.mxu0 0.0
    %96 = vmatprep.subr.mxu0 0.0
    %97 = vmatpush2.xpose.msra.mxu0 0.0
    %98 = vmatprep.subr.mxu0 0.0
    %99 = vmatpush2.xpose.msra.mxu0 0.0
    %100 = vmatprep.subr.mxu0 0.0
    %101 = vmatpush2.xpose.msra.mxu0 0.0
    %102 = vmatprep.subr.mxu0 0.0
    %103 = vmatpush2.xpose.msra.mxu0 0.0
    %104 = vmatprep.subr.mxu0 0.0
    %105 = vmatpush2.xpose.msra.mxu0 0.0
    %106 = vmatprep.subr.mxu0 0.0
    %107 = vmatpush2.xpose.msra.mxu0 0.0
    %108 = vmatprep.subr.mxu0 0.0
    %109 = vmatpush2.xpose.msra.mxu0 0.0
    %110 = vmatprep.subr.mxu0 0.0
    %111 = vmatpush2.xpose.msra.mxu0 0.0
    %112 = vmatprep.subr.mxu0 0.0
    %113 = vmatpush2.xpose.msra.mxu0 0.0
    %114 = vmatprep.subr.mxu0 0.0
    %115 = vmatpush2.xpose.msra.mxu0 0.0
    %116 = vmatprep.subr.mxu0 0.0
    %117 = vmatpush2.xpose.msra.mxu0 0.0
    %118 = vmatprep.mubr.f32.mxu0 0.0
    %119 = vmatmul.mubr.f32.gmra.mxu0 %v49
    %v120 = vpop.f32.mrf.mxu0
    %v121 = vadd.f32 %v45, %v120
    %v122 = vpop.f32.mrf.mxu0
    %123 = vdwg.mxu0
    %125 = vrot.lane.b32.xlu0 %v121, 1
    %v126 = vpop.permute.xlu0 %125
    %v128 = vsub.f32 %v121, %v126
    %v129 = vxor.u32 %v128, 2147483648
    %v130 = vmul.f32 %v129, 1.442695
    %v131 = vpow.pop %v130
    %v132 = vadd.f32 %v131, 1.0
    %v133 = vrcp.pop %v132
    %v134 = vmul.f32 1.0, %v133
    %v135 = vsub.f32 1.0, %v134
    %137 = vrot.lane.b32.xlu0 %v135, 127
    %v138 = vpop.permute.xlu0 %137
    %vm140 = vcmask 7168
    %v141 = vsel %vm140, %v138, %v134
    %vm142 = vcmask 15360
    %143 = vst.msk [vmem:[%s3] sm:$0xff] %vm142, %v141
    // Predicated region
    $region22: #{tpu_custom_call.1} parent=1 // pred_check
      _
    $region23: #{tpu_custom_call.1} parent=1 // pred_check_branch
      %145 = sbr.rel (0) target = $region25
    $region24: #{tpu_custom_call.1} parent=1 // pred_region
      _
    $region25: #{tpu_custom_call.1} parent=1 // pred_fallthru
      _
    // Predicated region
    $region26: #{tpu_custom_call.1} parent=1 // pred_check
      _
    $region27: #{tpu_custom_call.1} parent=1 // pred_check_branch
      %147 = sbr.rel (0) target = $region29
    $region28: #{tpu_custom_call.1} parent=1 // pred_region
      _
    $region29: #{tpu_custom_call.1} parent=1 // pred_fallthru
      _
    %148 = vsyncpa [#allocation3], 1
    %149 = vsyncpa [#allocation5], 1

</llo_original>
